<compile_context>
chip_gen: v7x
topology: tpu7x:2x2x1
jax: 0.10.0
libtpu: 0.0.40
codegen_flags: <defaults>
</compile_context>

<pallas_src>
import jax
import jax.numpy as jnp
from jax.experimental import pallas as pl
from jax.experimental.pallas import tpu as pltpu

N = 10      # number of basis intervals -> N+1 MLP blocks
H = 20      # hidden width of each Blocks_v MLP
DIN = 2
DOUT = 2


def _vector_kernel(idx_ref, phi_ref, x_ref, w1_ref, b1_ref, w2_ref, b2_ref,
                   w3_ref, b3_ref, y_ref):
    """Grid-less kernel: all weights VMEM-resident, loop over the <=2 active blocks."""
    x = x_ref[...]                                                     # (B, DIN)
    acc = jnp.zeros(y_ref.shape, jnp.float32)
    for s in range(2):                                                 # unrolled
        i = idx_ref[s]                                                 # SMEM scalar: active block id
        h = jnp.dot(x, w1_ref[i], preferred_element_type=jnp.float32) + b1_ref[i]
        h = jnp.maximum(h, 0.0)
        h = jnp.dot(h, w2_ref[i], preferred_element_type=jnp.float32) + b2_ref[i]
        h = jnp.maximum(h, 0.0)
        o = jnp.dot(h, w3_ref[i], preferred_element_type=jnp.float32) + b3_ref[i]
        acc = acc + o * phi_ref[s]                                     # SMEM scalar weight
    y_ref[...] = acc


def _active_blocks(t):
    """Indices / weights of the (at most two) nonzero Phi(t) entries.

    Matches the PyTorch Phi(): t0 = round(t * N); basis[t0] = ((t0+1)/N - t)*N;
    basis[t0+1] = (t - t0/N)*N only if t0 < N.  (round, NOT floor, to match the
    original module exactly.)
    """
    t = jnp.asarray(t, jnp.float32)
    t0 = jnp.round(t * N).astype(jnp.int32)
    t0f = t0.astype(jnp.float32)
    phi0 = ((t0f + 1.0) / N - t) * N
    phi1 = jnp.where(t0 < N, (t - t0f / N) * N, 0.0)
    idx = jnp.stack([t0, jnp.minimum(t0 + 1, N)]).astype(jnp.int32)    # (2,)
    phi = jnp.stack([phi0, phi1]).astype(jnp.float32)                  # (2,)
    return idx, phi


@jax.jit
def vector_forward(x, t, params):
    w1, b1, w2, b2, w3, b3 = params
    idx, phi = _active_blocks(t)
    B = x.shape[0]
    return pl.pallas_call(
        _vector_kernel,
        out_shape=jax.ShapeDtypeStruct((B, DOUT), jnp.float32),
        in_specs=[
            pl.BlockSpec(memory_space=pltpu.MemorySpace.SMEM),   # idx (2,) int32
            pl.BlockSpec(memory_space=pltpu.MemorySpace.SMEM),   # phi (2,) f32
            pl.BlockSpec(memory_space=pltpu.MemorySpace.VMEM),   # x   (B, DIN)
            pl.BlockSpec(memory_space=pltpu.MemorySpace.VMEM),   # W1  (N+1, DIN, H)
            pl.BlockSpec(memory_space=pltpu.MemorySpace.VMEM),   # b1  (N+1, 1, H)
            pl.BlockSpec(memory_space=pltpu.MemorySpace.VMEM),   # W2  (N+1, H, H)
            pl.BlockSpec(memory_space=pltpu.MemorySpace.VMEM),   # b2  (N+1, 1, H)
            pl.BlockSpec(memory_space=pltpu.MemorySpace.VMEM),   # W3  (N+1, H, DOUT)
            pl.BlockSpec(memory_space=pltpu.MemorySpace.VMEM),   # b3  (N+1, 1, DOUT)
        ],
        out_specs=pl.BlockSpec(memory_space=pltpu.MemorySpace.VMEM),
    )(idx, phi, x, w1, b1, w2, b2, w3, b3)


# ---------------------------------------------------------------------------
# Pure-JAX reference (mirrors the PyTorch module: loops over all N+1 blocks).
# ---------------------------------------------------------------------------
def phi_basis(t):
    """JAX equivalent of Phi(t): shape (N+1,), at most two nonzero entries."""
    t = jnp.asarray(t, jnp.float32)
    t0 = jnp.round(t * N).astype(jnp.int32)          # matches PyTorch round(t.item()*N)
    idx = jnp.arange(N + 1, dtype=jnp.int32)
    v0 = ((t0.astype(jnp.float32) + 1.0) / N - t) * N
    v1 = (t - t0.astype(jnp.float32) / N) * N
    basis = jnp.where(idx == t0, v0, 0.0)
    basis = jnp.where((idx == t0 + 1) & (t0 < N), v1, basis)
    return basis.astype(jnp.float32)


def vector_reference(x, t, params):
    w1, b1, w2, b2, w3, b3 = params
    phi = phi_basis(t)
    y = jnp.zeros((x.shape[0], DOUT), jnp.float32)
    for i in range(N + 1):
        h = jax.nn.relu(x @ w1[i] + b1[i, 0])
        h = jax.nn.relu(h @ w2[i] + b2[i, 0])
        o = h @ w3[i] + b3[i, 0]
        y = y + o * phi[i]
    return y


def init_params(key):
    """Deterministic synthetic init: weights ~ N(0, 0.1), biases = 0
    (mirrors Blocks_v.__init__)."""
    k1, k2, k3 = jax.random.split(key, 3)
    w1 = 0.1 * jax.random.normal(k1, (N + 1, DIN, H), jnp.float32)
    w2 = 0.1 * jax.random.normal(k2, (N + 1, H, H), jnp.float32)
    w3 = 0.1 * jax.random.normal(k3, (N + 1, H, DOUT), jnp.float32)
    b1 = jnp.zeros((N + 1, 1, H), jnp.float32)
    b2 = jnp.zeros((N + 1, 1, H), jnp.float32)
    b3 = jnp.zeros((N + 1, 1, DOUT), jnp.float32)
    return (w1, b1, w2, b2, w3, b3)


if __name__ == "__main__":
    key = jax.random.PRNGKey(0)
    kp, kx = jax.random.split(key)
    params = init_params(kp)

    B = 8
    x = jax.random.normal(kx, (B, DIN), jnp.float32)

    # Check a few t values: interior interpolation, round-up extrapolation path
    # (matches PyTorch's round()), and the t0 == N boundary.
    for t_val in (0.33, 0.36, 1.0):
        t = jnp.float32(t_val)
        y = jax.block_until_ready(vector_forward(x, t, params))
        y_ref = vector_reference(x, t, params)
        assert y.shape == (B, DOUT)
        assert jnp.allclose(y, y_ref, atol=1e-5, rtol=1e-5), f"mismatch at t={t_val}"

    print("KERNEL_OK")
</pallas_src>

<mosaic_0001>
module attributes {stable_mosaic.version = 11 : i64} {
  func.func @_vector_kernel(%arg0: memref<2xi32, #tpu.memory_space<smem>>, %arg1: memref<2xf32, #tpu.memory_space<smem>>, %arg2: memref<8x2xf32, #tpu.memory_space<vmem>>, %arg3: memref<11x2x20xf32, #tpu.memory_space<vmem>>, %arg4: memref<11x1x20xf32, #tpu.memory_space<vmem>>, %arg5: memref<11x20x20xf32, #tpu.memory_space<vmem>>, %arg6: memref<11x1x20xf32, #tpu.memory_space<vmem>>, %arg7: memref<11x20x2xf32, #tpu.memory_space<vmem>>, %arg8: memref<11x1x2xf32, #tpu.memory_space<vmem>>, %arg9: memref<8x2xf32, #tpu.memory_space<vmem>>) attributes {dimension_semantics = [], scalar_prefetch = 0 : i64, scratch_operands = 0 : i64, tpu.core_type = #tpu.core_type<tc>} {
    %c0 = arith.constant 0 : index
    %c0_0 = arith.constant 0 : index
    %0 = vector.load %arg2[%c0, %c0_0] : memref<8x2xf32, #tpu.memory_space<vmem>>, vector<8x2xf32>
    %cst = arith.constant 0.000000e+00 : f32
    %1 = vector.broadcast %cst : f32 to vector<8x2xf32>
    %c0_1 = arith.constant 0 : index
    %2 = memref.load %arg0[%c0_1] : memref<2xi32, #tpu.memory_space<smem>>
    %3 = arith.index_cast %2 : i32 to index
    %c0_2 = arith.constant 0 : index
    %c0_3 = arith.constant 0 : index
    %4 = vector.load %arg3[%3, %c0_2, %c0_3] : memref<11x2x20xf32, #tpu.memory_space<vmem>>, vector<1x2x20xf32>
    %5 = vector.shape_cast %4 : vector<1x2x20xf32> to vector<2x20xf32>
    %cst_4 = arith.constant dense<0.000000e+00> : vector<8x20xf32>
    %6 = tpu.matmul %0, %5, %cst_4 {dimension_numbers = #tpu.dot_dimension_numbers<[1], [0], [0], [1], [0, 0, 1, 1], [], []>} : vector<8x2xf32>, vector<2x20xf32>, vector<8x20xf32> -> vector<8x20xf32>
    %7 = arith.index_cast %2 : i32 to index
    %c0_5 = arith.constant 0 : index
    %c0_6 = arith.constant 0 : index
    %8 = vector.load %arg4[%7, %c0_5, %c0_6] : memref<11x1x20xf32, #tpu.memory_space<vmem>>, vector<1x1x20xf32>
    %9 = vector.shape_cast %8 : vector<1x1x20xf32> to vector<1x20xf32>
    %10 = vector.broadcast %9 : vector<1x20xf32> to vector<8x20xf32>
    %11 = arith.addf %6, %10 : vector<8x20xf32>
    %cst_7 = arith.constant 0.000000e+00 : f32
    %12 = vector.broadcast %cst_7 : f32 to vector<8x20xf32>
    %13 = arith.maximumf %11, %12 : vector<8x20xf32>
    %14 = arith.index_cast %2 : i32 to index
    %c0_8 = arith.constant 0 : index
    %c0_9 = arith.constant 0 : index
    %15 = vector.load %arg5[%14, %c0_8, %c0_9] : memref<11x20x20xf32, #tpu.memory_space<vmem>>, vector<1x20x20xf32>
    %16 = vector.shape_cast %15 : vector<1x20x20xf32> to vector<20x20xf32>
    %cst_10 = arith.constant dense<0.000000e+00> : vector<8x20xf32>
    %17 = tpu.matmul %13, %16, %cst_10 {dimension_numbers = #tpu.dot_dimension_numbers<[1], [0], [0], [1], [0, 0, 1, 1], [], []>} : vector<8x20xf32>, vector<20x20xf32>, vector<8x20xf32> -> vector<8x20xf32>
    %18 = arith.index_cast %2 : i32 to index
    %c0_11 = arith.constant 0 : index
    %c0_12 = arith.constant 0 : index
    %19 = vector.load %arg6[%18, %c0_11, %c0_12] : memref<11x1x20xf32, #tpu.memory_space<vmem>>, vector<1x1x20xf32>
    %20 = vector.shape_cast %19 : vector<1x1x20xf32> to vector<1x20xf32>
    %21 = vector.broadcast %20 : vector<1x20xf32> to vector<8x20xf32>
    %22 = arith.addf %17, %21 : vector<8x20xf32>
    %cst_13 = arith.constant 0.000000e+00 : f32
    %23 = vector.broadcast %cst_13 : f32 to vector<8x20xf32>
    %24 = arith.maximumf %22, %23 : vector<8x20xf32>
    %25 = arith.index_cast %2 : i32 to index
    %c0_14 = arith.constant 0 : index
    %c0_15 = arith.constant 0 : index
    %26 = vector.load %arg7[%25, %c0_14, %c0_15] : memref<11x20x2xf32, #tpu.memory_space<vmem>>, vector<1x20x2xf32>
    %27 = vector.shape_cast %26 : vector<1x20x2xf32> to vector<20x2xf32>
    %cst_16 = arith.constant dense<0.000000e+00> : vector<8x2xf32>
    %28 = tpu.matmul %24, %27, %cst_16 {dimension_numbers = #tpu.dot_dimension_numbers<[1], [0], [0], [1], [0, 0, 1, 1], [], []>} : vector<8x20xf32>, vector<20x2xf32>, vector<8x2xf32> -> vector<8x2xf32>
    %29 = arith.index_cast %2 : i32 to index
    %c0_17 = arith.constant 0 : index
    %c0_18 = arith.constant 0 : index
    %30 = vector.load %arg8[%29, %c0_17, %c0_18] : memref<11x1x2xf32, #tpu.memory_space<vmem>>, vector<1x1x2xf32>
    %31 = vector.shape_cast %30 : vector<1x1x2xf32> to vector<1x2xf32>
    %32 = vector.broadcast %31 : vector<1x2xf32> to vector<8x2xf32>
    %33 = arith.addf %28, %32 : vector<8x2xf32>
    %c0_19 = arith.constant 0 : index
    %34 = memref.load %arg1[%c0_19] : memref<2xf32, #tpu.memory_space<smem>>
    %35 = vector.broadcast %34 : f32 to vector<8x2xf32>
    %36 = arith.mulf %33, %35 : vector<8x2xf32>
    %37 = arith.addf %1, %36 : vector<8x2xf32>
    %c1 = arith.constant 1 : index
    %38 = memref.load %arg0[%c1] : memref<2xi32, #tpu.memory_space<smem>>
    %39 = arith.index_cast %38 : i32 to index
    %c0_20 = arith.constant 0 : index
    %c0_21 = arith.constant 0 : index
    %40 = vector.load %arg3[%39, %c0_20, %c0_21] : memref<11x2x20xf32, #tpu.memory_space<vmem>>, vector<1x2x20xf32>
    %41 = vector.shape_cast %40 : vector<1x2x20xf32> to vector<2x20xf32>
    %cst_22 = arith.constant dense<0.000000e+00> : vector<8x20xf32>
    %42 = tpu.matmul %0, %41, %cst_22 {dimension_numbers = #tpu.dot_dimension_numbers<[1], [0], [0], [1], [0, 0, 1, 1], [], []>} : vector<8x2xf32>, vector<2x20xf32>, vector<8x20xf32> -> vector<8x20xf32>
    %43 = arith.index_cast %38 : i32 to index
    %c0_23 = arith.constant 0 : index
    %c0_24 = arith.constant 0 : index
    %44 = vector.load %arg4[%43, %c0_23, %c0_24] : memref<11x1x20xf32, #tpu.memory_space<vmem>>, vector<1x1x20xf32>
    %45 = vector.shape_cast %44 : vector<1x1x20xf32> to vector<1x20xf32>
    %46 = vector.broadcast %45 : vector<1x20xf32> to vector<8x20xf32>
    %47 = arith.addf %42, %46 : vector<8x20xf32>
    %cst_25 = arith.constant 0.000000e+00 : f32
    %48 = vector.broadcast %cst_25 : f32 to vector<8x20xf32>
    %49 = arith.maximumf %47, %48 : vector<8x20xf32>
    %50 = arith.index_cast %38 : i32 to index
    %c0_26 = arith.constant 0 : index
    %c0_27 = arith.constant 0 : index
    %51 = vector.load %arg5[%50, %c0_26, %c0_27] : memref<11x20x20xf32, #tpu.memory_space<vmem>>, vector<1x20x20xf32>
    %52 = vector.shape_cast %51 : vector<1x20x20xf32> to vector<20x20xf32>
    %cst_28 = arith.constant dense<0.000000e+00> : vector<8x20xf32>
    %53 = tpu.matmul %49, %52, %cst_28 {dimension_numbers = #tpu.dot_dimension_numbers<[1], [0], [0], [1], [0, 0, 1, 1], [], []>} : vector<8x20xf32>, vector<20x20xf32>, vector<8x20xf32> -> vector<8x20xf32>
    %54 = arith.index_cast %38 : i32 to index
    %c0_29 = arith.constant 0 : index
    %c0_30 = arith.constant 0 : index
    %55 = vector.load %arg6[%54, %c0_29, %c0_30] : memref<11x1x20xf32, #tpu.memory_space<vmem>>, vector<1x1x20xf32>
    %56 = vector.shape_cast %55 : vector<1x1x20xf32> to vector<1x20xf32>
    %57 = vector.broadcast %56 : vector<1x20xf32> to vector<8x20xf32>
    %58 = arith.addf %53, %57 : vector<8x20xf32>
    %cst_31 = arith.constant 0.000000e+00 : f32
    %59 = vector.broadcast %cst_31 : f32 to vector<8x20xf32>
    %60 = arith.maximumf %58, %59 : vector<8x20xf32>
    %61 = arith.index_cast %38 : i32 to index
    %c0_32 = arith.constant 0 : index
    %c0_33 = arith.constant 0 : index
    %62 = vector.load %arg7[%61, %c0_32, %c0_33] : memref<11x20x2xf32, #tpu.memory_space<vmem>>, vector<1x20x2xf32>
    %63 = vector.shape_cast %62 : vector<1x20x2xf32> to vector<20x2xf32>
    %cst_34 = arith.constant dense<0.000000e+00> : vector<8x2xf32>
    %64 = tpu.matmul %60, %63, %cst_34 {dimension_numbers = #tpu.dot_dimension_numbers<[1], [0], [0], [1], [0, 0, 1, 1], [], []>} : vector<8x20xf32>, vector<20x2xf32>, vector<8x2xf32> -> vector<8x2xf32>
    %65 = arith.index_cast %38 : i32 to index
    %c0_35 = arith.constant 0 : index
    %c0_36 = arith.constant 0 : index
    %66 = vector.load %arg8[%65, %c0_35, %c0_36] : memref<11x1x2xf32, #tpu.memory_space<vmem>>, vector<1x1x2xf32>
    %67 = vector.shape_cast %66 : vector<1x1x2xf32> to vector<1x2xf32>
    %68 = vector.broadcast %67 : vector<1x2xf32> to vector<8x2xf32>
    %69 = arith.addf %64, %68 : vector<8x2xf32>
    %c1_37 = arith.constant 1 : index
    %70 = memref.load %arg1[%c1_37] : memref<2xf32, #tpu.memory_space<smem>>
    %71 = vector.broadcast %70 : f32 to vector<8x2xf32>
    %72 = arith.mulf %69, %71 : vector<8x2xf32>
    %73 = arith.addf %37, %72 : vector<8x2xf32>
    %c0_38 = arith.constant 0 : index
    %c0_39 = arith.constant 0 : index
    %74 = vector.load %arg9[%c0_38, %c0_39] : memref<8x2xf32, #tpu.memory_space<vmem>>, vector<8x2xf32>
    tpu.vector_store %arg9[%c0_38, %c0_39], %73 {strides = array<i32>} : memref<8x2xf32, #tpu.memory_space<vmem>>, vector<8x2xf32>,
    return
  }
}

</mosaic_0001>

<llo_original>
// kernel: vector_forward.1
$region0: #{vector_forward.1}
  #allocation0 [shape = 'u32[]', space=smem, size = 0x4, offset = 0x4, fixed_abs, tag = 'smem constant byte address 0x4 - core index']
  #allocation1 [shape = 'u32[144,128]{1,0:T(1,128)}', space=vmem, size = 0x12000, scoped, tag = 'internal scratch']
  %s0 = inlined_call_operand.vmem [shape: s32[2], index: 0, kind: input, shape index: {}]
  %s1 = inlined_call_operand.vmem [shape: f32[2], index: 1, kind: input, shape index: {}]
  %s2 = inlined_call_operand.vmem [shape: f32[8,2], index: 2, kind: input, shape index: {}]
  %s3 = inlined_call_operand.vmem [shape: f32[11,2,20], index: 3, kind: input, shape index: {}]
  %s4 = inlined_call_operand.vmem [shape: f32[11,1,20], index: 4, kind: input, shape index: {}]
  %s5 = inlined_call_operand.vmem [shape: f32[11,20,20], index: 5, kind: input, shape index: {}]
  %s6 = inlined_call_operand.vmem [shape: f32[11,1,20], index: 6, kind: input, shape index: {}]
  %s7 = inlined_call_operand.vmem [shape: f32[11,20,2], index: 7, kind: input, shape index: {}]
  %s8 = inlined_call_operand.vmem [shape: f32[11,1,2], index: 8, kind: input, shape index: {}]
  %s9 = inlined_call_operand.vmem [shape: f32[8,2], index: 9, kind: output, shape index: {}]
  %s10 = sld [smem:[#allocation0]]
  $region54: #{vector_forward.1} parent=0
    _
  %s12 = ssub.s32 1, %s10
  %s13 = scalar_select 0, %s12, %s10
  $region1: #{vector_forward.1} parent=0
    #allocation2 [shape = 'u8[512]{0}', space=smem, size = 0x200, scoped, tag = 'input window, operand 0, single buffered']
    #allocation3 [shape = 's32[1]{0}', space=sflag, size = 0x4, scoped, tag = 'scoped memory for vector_forward.1']
    #allocation4 [shape = 'u8[512]{0}', space=smem, size = 0x200, scoped, tag = 'input window, operand 1, single buffered']
    #allocation5 [shape = 's32[1]{0}', space=sflag, size = 0x4, scoped, tag = 'scoped memory for vector_forward.1']
    %14 = vsyncpa [#allocation3], 0
    %15 = vsyncpa [#allocation5], 0
    // Predicated region
    $region2: #{vector_forward.1} parent=1 // pred_check
      _
    $region3: #{vector_forward.1} parent=1 // pred_check_branch
      %17 = sbr.rel (0) target = $region5
    $region4: #{vector_forward.1} parent=1 // pred_region
      %s19 = ssub.s32 16, 16
      %20 = vsyncadd [#allocation3], %s19
      %s22 = sshll.u32 %s0, 4
      %s23 = int_to_ptr.vmem [resolvable:$true] %s22
      %25 = dma.vmem_to_smem %s23, 16, [#allocation2], [#allocation3]
    $region5: #{vector_forward.1} parent=1 // pred_fallthru
      _
    // Predicated region
    $region6: #{vector_forward.1} parent=1 // pred_check
      _
    $region7: #{vector_forward.1} parent=1 // pred_check_branch
      %27 = sbr.rel (0) target = $region9
    $region8: #{vector_forward.1} parent=1 // pred_region
      %s29 = ssub.s32 16, 16
      %30 = vsyncadd [#allocation5], %s29
      %s32 = sshll.u32 %s1, 4
      %s33 = int_to_ptr.vmem [resolvable:$true] %s32
      %35 = dma.vmem_to_smem %s33, 16, [#allocation4], [#allocation5]
    $region9: #{vector_forward.1} parent=1 // pred_fallthru
      _
    // Predicated region
    $region10: #{vector_forward.1} parent=1 // pred_check
      _
    $region11: #{vector_forward.1} parent=1 // pred_check_branch
      %37 = sbr.rel (0) target = $region13
    $region12: #{vector_forward.1} parent=1 // pred_region
      _
    $region13: #{vector_forward.1} parent=1 // pred_fallthru
      _
    // Predicated region
    $region14: #{vector_forward.1} parent=1 // pred_check
      _
    $region15: #{vector_forward.1} parent=1 // pred_check_branch
      %39 = sbr.rel (0) target = $region17
    $region16: #{vector_forward.1} parent=1 // pred_region
      _
    $region17: #{vector_forward.1} parent=1 // pred_fallthru
      _
    // Predicated region
    $region18: #{vector_forward.1} parent=1 // pred_check
      _
    $region19: #{vector_forward.1} parent=1 // pred_check_branch
      %41 = sbr.rel (0) target = $region21
    $region20: #{vector_forward.1} parent=1 // pred_region
      _
    $region21: #{vector_forward.1} parent=1 // pred_fallthru
      _
    // Predicated region
    $region22: #{vector_forward.1} parent=1 // pred_check
      _
    $region23: #{vector_forward.1} parent=1 // pred_check_branch
      %43 = sbr.rel (0) target = $region25
    $region24: #{vector_forward.1} parent=1 // pred_region
      _
    $region25: #{vector_forward.1} parent=1 // pred_fallthru
      _
    // Predicated region
    $region26: #{vector_forward.1} parent=1 // pred_check
      _
    $region27: #{vector_forward.1} parent=1 // pred_check_branch
      %45 = sbr.rel (0) target = $region29
    $region28: #{vector_forward.1} parent=1 // pred_region
      _
    $region29: #{vector_forward.1} parent=1 // pred_fallthru
      _
    // Predicated region
    $region30: #{vector_forward.1} parent=1 // pred_check
      _
    $region31: #{vector_forward.1} parent=1 // pred_check_branch
      %47 = sbr.rel (0) target = $region33
    $region32: #{vector_forward.1} parent=1 // pred_region
      _
    $region33: #{vector_forward.1} parent=1 // pred_fallthru
      _
    // Predicated region
    $region34: #{vector_forward.1} parent=1 // pred_check
      _
    $region35: #{vector_forward.1} parent=1 // pred_check_branch
      %49 = sbr.rel (0) target = $region37
    $region36: #{vector_forward.1} parent=1 // pred_region
      _
    $region37: #{vector_forward.1} parent=1 // pred_fallthru
      _
    // Predicated region
    $region38: #{vector_forward.1} parent=1 // pred_check
      _
    $region39: #{vector_forward.1} parent=1 // pred_check_branch
      %51 = sbr.rel (0) target = $region41
    $region40: #{vector_forward.1} parent=1 // pred_region
      %52 = dma.done [#allocation3], 16
    $region41: #{vector_forward.1} parent=1 // pred_fallthru
      _
    // Predicated region
    $region42: #{vector_forward.1} parent=1 // pred_check
      _
    $region43: #{vector_forward.1} parent=1 // pred_check_branch
      %54 = sbr.rel (0) target = $region45
    $region44: #{vector_forward.1} parent=1 // pred_region
      %55 = dma.done [#allocation5], 16
    $region45: #{vector_forward.1} parent=1 // pred_fallthru
      _
    %56 = sfence
    %v57 = vld [vmem:[%s2] sm:$0xff]
    %s58 = sld [smem:[#allocation2]]
    %s59 = smul.u32 %s58, 2
    %s60 = scalar_lea.vmem %s3, %s59
    %v61 = vld [vmem:[%s60] sm:$0x3]
    %s62 = scalar_lea.vmem %s4, %s58
    %v63 = vld [vmem:[%s62] sm:$0x1]
    %v65 = vlaneseq
    %v66 = vshrl.u32 %v65, 7
    %v67 = vsub.s32 0, %v66
    %v68 = vrot.slane %v63, %v67
    %vm70 = vcmask 15360
    %v72 = vsel %vm70, %v57, 0
    %vm74 = vcmask 1041408
    %v76 = vsel %vm74, %v61, 0
    %78 = vmatprep.subr.mxu0 0.0
    %79 = vmatpush1.msra.mxu0 %v76
    %80 = vmatprep.subr.mxu0 0.0
    %81 = vmatpush1.msra.mxu0 0.0
    %82 = vmatprep.subr.mxu0 0.0
    %83 = vmatpush1.msra.mxu0 0.0
    %84 = vmatprep.subr.mxu0 0.0
    %85 = vmatpush1.msra.mxu0 0.0
    %86 = vmatprep.subr.mxu0 0.0
    %87 = vmatpush1.msra.mxu0 0.0
    %88 = vmatprep.subr.mxu0 0.0
    %89 = vmatpush1.msra.mxu0 0.0
    %90 = vmatprep.subr.mxu0 0.0
    %91 = vmatpush1.msra.mxu0 0.0
    %92 = vmatprep.subr.mxu0 0.0
    %93 = vmatpush1.msra.mxu0 0.0
    %94 = vmatprep.subr.mxu0 0.0
    %95 = vmatpush1.msra.mxu0 0.0
    %96 = vmatprep.subr.mxu0 0.0
    %97 = vmatpush1.msra.mxu0 0.0
    %98 = vmatprep.subr.mxu0 0.0
    %99 = vmatpush1.msra.mxu0 0.0
    %100 = vmatprep.subr.mxu0 0.0
    %101 = vmatpush1.msra.mxu0 0.0
    %102 = vmatprep.subr.mxu0 0.0
    %103 = vmatpush1.msra.mxu0 0.0
    %104 = vmatprep.subr.mxu0 0.0
    %105 = vmatpush1.msra.mxu0 0.0
    %106 = vmatprep.subr.mxu0 0.0
    %107 = vmatpush1.msra.mxu0 0.0
    %108 = vmatprep.subr.mxu0 0.0
    %109 = vmatpush1.msra.mxu0 0.0
    %110 = vmatprep.subr.mxu0 0.0
    %111 = vmatpush1.msra.mxu0 0.0
    %112 = vmatprep.subr.mxu0 0.0
    %113 = vmatpush1.msra.mxu0 0.0
    %114 = vmatprep.subr.mxu0 0.0
    %115 = vmatpush1.msra.mxu0 0.0
    %116 = vmatprep.subr.mxu0 0.0
    %117 = vmatpush1.msra.mxu0 0.0
    %118 = vmatprep.subr.mxu0 0.0
    %119 = vmatpush1.msra.mxu0 0.0
    %120 = vmatprep.subr.mxu0 0.0
    %121 = vmatpush1.msra.mxu0 0.0
    %122 = vmatprep.subr.mxu0 0.0
    %123 = vmatpush1.msra.mxu0 0.0
    %124 = vmatprep.subr.mxu0 0.0
    %125 = vmatpush1.msra.mxu0 0.0
    %126 = vmatprep.subr.mxu0 0.0
    %127 = vmatpush1.msra.mxu0 0.0
    %128 = vmatprep.subr.mxu0 0.0
    %129 = vmatpush1.msra.mxu0 0.0
    %130 = vmatprep.subr.mxu0 0.0
    %131 = vmatpush1.msra.mxu0 0.0
    %132 = vmatprep.subr.mxu0 0.0
    %133 = vmatpush1.msra.mxu0 0.0
    %134 = vmatprep.subr.mxu0 0.0
    %135 = vmatpush1.msra.mxu0 0.0
    %136 = vmatprep.subr.mxu0 0.0
    %137 = vmatpush1.msra.mxu0 0.0
    %138 = vmatprep.subr.mxu0 0.0
    %139 = vmatpush1.msra.mxu0 0.0
    %140 = vmatprep.subr.mxu0 0.0
    %141 = vmatpush1.msra.mxu0 0.0
    %142 = vmatprep.mubr.f32.mxu0 0.0
    %143 = vmatmul.mubr.f32.gmra.mrb[0].mxu0 %v72
    %v144 = vpop.f32.mrb[0].mxu0
    %v145 = vadd.f32 %v68, %v144
    %v146 = vpop.f32.mrb[0].mxu0
    %147 = vdwg.mxu0
    %v148 = vmax.f32 %v145, 0.0
    %s149 = smul.u32 %s58, 24
    %s150 = scalar_lea.vmem %s5, %s149
    %v151 = vld [vmem:[%s150] sm:$0xff]
    %v152 = vld [vmem:[%s150 + $0x8] sm:$0xff]
    %v153 = vld [vmem:[%s150 + $0x10] sm:$0xf]
    %s154 = scalar_lea.vmem %s6, %s58
    %v155 = vld [vmem:[%s154] sm:$0x1]
    %v157 = vlaneseq
    %v158 = vshrl.u32 %v157, 7
    %v159 = vsub.s32 0, %v158
    %v160 = vrot.slane %v155, %v159
    %vm162 = vcmask 162816
    %v164 = vsel %vm162, %v148, 0
    %vm166 = vcmask 1043456
    %v168 = vsel %vm166, %v153, 0
    %170 = vmatprep.subr.mxu0 0.0
    %171 = vmatpush1.msra.mxu0 %v151
    %172 = vmatprep.subr.mxu0 0.0
    %173 = vmatpush1.msra.mxu0 %v152
    %174 = vmatprep.subr.mxu0 0.0
    %175 = vmatpush1.msra.mxu0 %v168
    %176 = vmatprep.subr.mxu0 0.0
    %177 = vmatpush1.msra.mxu0 0.0
    %178 = vmatprep.subr.mxu0 0.0
    %179 = vmatpush1.msra.mxu0 0.0
    %180 = vmatprep.subr.mxu0 0.0
    %181 = vmatpush1.msra.mxu0 0.0
    %182 = vmatprep.subr.mxu0 0.0
    %183 = vmatpush1.msra.mxu0 0.0
    %184 = vmatprep.subr.mxu0 0.0
    %185 = vmatpush1.msra.mxu0 0.0
    %186 = vmatprep.subr.mxu0 0.0
    %187 = vmatpush1.msra.mxu0 0.0
    %188 = vmatprep.subr.mxu0 0.0
    %189 = vmatpush1.msra.mxu0 0.0
    %190 = vmatprep.subr.mxu0 0.0
    %191 = vmatpush1.msra.mxu0 0.0
    %192 = vmatprep.subr.mxu0 0.0
    %193 = vmatpush1.msra.mxu0 0.0
    %194 = vmatprep.subr.mxu0 0.0
    %195 = vmatpush1.msra.mxu0 0.0
    %196 = vmatprep.subr.mxu0 0.0
    %197 = vmatpush1.msra.mxu0 0.0
    %198 = vmatprep.subr.mxu0 0.0
    %199 = vmatpush1.msra.mxu0 0.0
    %200 = vmatprep.subr.mxu0 0.0
    %201 = vmatpush1.msra.mxu0 0.0
    %202 = vmatprep.subr.mxu0 0.0
    %203 = vmatpush1.msra.mxu0 0.0
    %204 = vmatprep.subr.mxu0 0.0
    %205 = vmatpush1.msra.mxu0 0.0
    %206 = vmatprep.subr.mxu0 0.0
    %207 = vmatpush1.msra.mxu0 0.0
    %208 = vmatprep.subr.mxu0 0.0
    %209 = vmatpush1.msra.mxu0 0.0
    %210 = vmatprep.subr.mxu0 0.0
    %211 = vmatpush1.msra.mxu0 0.0
    %212 = vmatprep.subr.mxu0 0.0
    %213 = vmatpush1.msra.mxu0 0.0
    %214 = vmatprep.subr.mxu0 0.0
    %215 = vmatpush1.msra.mxu0 0.0
    %216 = vmatprep.subr.mxu0 0.0
    %217 = vmatpush1.msra.mxu0 0.0
    %218 = vmatprep.subr.mxu0 0.0
    %219 = vmatpush1.msra.mxu0 0.0
    %220 = vmatprep.subr.mxu0 0.0
    %221 = vmatpush1.msra.mxu0 0.0
    %222 = vmatprep.subr.mxu0 0.0
    %223 = vmatpush1.msra.mxu0 0.0
    %224 = vmatprep.subr.mxu0 0.0
    %225 = vmatpush1.msra.mxu0 0.0
    %226 = vmatprep.subr.mxu0 0.0
    %227 = vmatpush1.msra.mxu0 0.0
    %228 = vmatprep.subr.mxu0 0.0
    %229 = vmatpush1.msra.mxu0 0.0
    %230 = vmatprep.subr.mxu0 0.0
    %231 = vmatpush1.msra.mxu0 0.0
    %232 = vmatprep.subr.mxu0 0.0
    %233 = vmatpush1.msra.mxu0 0.0
    %234 = vmatprep.mubr.f32.mxu0 0.0
    %235 = vmatmul.mubr.f32.gmra.mrb[0].mxu0 %v164
    %v236 = vpop.f32.mrb[0].mxu0
    %v237 = vadd.f32 %v160, %v236
    %v238 = vpop.f32.mrb[0].mxu0
    %239 = vdwg.mxu0
    %v240 = vmax.f32 %v237, 0.0
    %s241 = scalar_lea.vmem %s7, %s149
    %v242 = vld [vmem:[%s241] sm:$0xff]
    %v243 = vld [vmem:[%s241 + $0x8] sm:$0xff]
    %v244 = vld [vmem:[%s241 + $0x10] sm:$0xf]
    %s245 = scalar_lea.vmem %s8, %s58
    %v246 = vld [vmem:[%s245] sm:$0x1]
    %v248 = vlaneseq
    %v249 = vshrl.u32 %v248, 7
    %v250 = vsub.s32 0, %v249
    %v251 = vrot.slane %v246, %v250
    %v254 = vsel %vm162, %v240, 0
    %v257 = vsel %vm166, %v244, 0
    %259 = vmatprep.subr.mxu0 0.0
    %260 = vmatpush1.msra.mxu0 %v242
    %261 = vmatprep.subr.mxu0 0.0
    %262 = vmatpush1.msra.mxu0 %v243
    %263 = vmatprep.subr.mxu0 0.0
    %264 = vmatpush1.msra.mxu0 %v257
    %265 = vmatprep.subr.mxu0 0.0
    %266 = vmatpush1.msra.mxu0 0.0
    %267 = vmatprep.subr.mxu0 0.0
    %268 = vmatpush1.msra.mxu0 0.0
    %269 = vmatprep.subr.mxu0 0.0
    %270 = vmatpush1.msra.mxu0 0.0
    %271 = vmatprep.subr.mxu0 0.0
    %272 = vmatpush1.msra.mxu0 0.0
    %273 = vmatprep.subr.mxu0 0.0
    %274 = vmatpush1.msra.mxu0 0.0
    %275 = vmatprep.subr.mxu0 0.0
    %276 = vmatpush1.msra.mxu0 0.0
    %277 = vmatprep.subr.mxu0 0.0
    %278 = vmatpush1.msra.mxu0 0.0
    %279 = vmatprep.subr.mxu0 0.0
    %280 = vmatpush1.msra.mxu0 0.0
    %281 = vmatprep.subr.mxu0 0.0
    %282 = vmatpush1.msra.mxu0 0.0
    %283 = vmatprep.subr.mxu0 0.0
    %284 = vmatpush1.msra.mxu0 0.0
    %285 = vmatprep.subr.mxu0 0.0
    %286 = vmatpush1.msra.mxu0 0.0
    %287 = vmatprep.subr.mxu0 0.0
    %288 = vmatpush1.msra.mxu0 0.0
    %289 = vmatprep.subr.mxu0 0.0
    %290 = vmatpush1.msra.mxu0 0.0
    %291 = vmatprep.subr.mxu0 0.0
    %292 = vmatpush1.msra.mxu0 0.0
    %293 = vmatprep.subr.mxu0 0.0
    %294 = vmatpush1.msra.mxu0 0.0
    %295 = vmatprep.subr.mxu0 0.0
    %296 = vmatpush1.msra.mxu0 0.0
    %297 = vmatprep.subr.mxu0 0.0
    %298 = vmatpush1.msra.mxu0 0.0
    %299 = vmatprep.subr.mxu0 0.0
    %300 = vmatpush1.msra.mxu0 0.0
    %301 = vmatprep.subr.mxu0 0.0
    %302 = vmatpush1.msra.mxu0 0.0
    %303 = vmatprep.subr.mxu0 0.0
    %304 = vmatpush1.msra.mxu0 0.0
    %305 = vmatprep.subr.mxu0 0.0
    %306 = vmatpush1.msra.mxu0 0.0
    %307 = vmatprep.subr.mxu0 0.0
    %308 = vmatpush1.msra.mxu0 0.0
    %309 = vmatprep.subr.mxu0 0.0
    %310 = vmatpush1.msra.mxu0 0.0
    %311 = vmatprep.subr.mxu0 0.0
    %312 = vmatpush1.msra.mxu0 0.0
    %313 = vmatprep.subr.mxu0 0.0
    %314 = vmatpush1.msra.mxu0 0.0
    %315 = vmatprep.subr.mxu0 0.0
    %316 = vmatpush1.msra.mxu0 0.0
    %317 = vmatprep.subr.mxu0 0.0
    %318 = vmatpush1.msra.mxu0 0.0
    %319 = vmatprep.subr.mxu0 0.0
    %320 = vmatpush1.msra.mxu0 0.0
    %321 = vmatprep.subr.mxu0 0.0
    %322 = vmatpush1.msra.mxu0 0.0
    %323 = vmatprep.mubr.f32.mxu0 0.0
    %324 = vmatmul.mubr.f32.gmra.mrb[0].mxu0 %v254
    %v325 = vpop.f32.mrb[0].mxu0
    %v326 = vadd.f32 %v251, %v325
    %v327 = vpop.f32.mrb[0].mxu0
    %328 = vdwg.mxu0
    %s329 = sld [smem:[#allocation4]]
    %v330 = vstv %s329
    %v331 = vmul.f32 %v326, %v330
    %v332 = vadd.f32 %v331, 0.0
    %s333 = sld [smem:[#allocation2 + $0x1]]
    %s334 = smul.u32 %s333, 2
    %s335 = scalar_lea.vmem %s3, %s334
    %v336 = vld [vmem:[%s335] sm:$0x3]
    %s337 = scalar_lea.vmem %s4, %s333
    %v338 = vld [vmem:[%s337] sm:$0x1]
    %v340 = vlaneseq
    %v341 = vshrl.u32 %v340, 7
    %v342 = vsub.s32 0, %v341
    %v343 = vrot.slane %v338, %v342
    %v346 = vsel %vm74, %v336, 0
    %348 = vmatprep.subr.mxu0 0.0
    %349 = vmatpush1.msra.mxu0 %v346
    %350 = vmatprep.subr.mxu0 0.0
    %351 = vmatpush1.msra.mxu0 0.0
    %352 = vmatprep.subr.mxu0 0.0
    %353 = vmatpush1.msra.mxu0 0.0
    %354 = vmatprep.subr.mxu0 0.0
    %355 = vmatpush1.msra.mxu0 0.0
    %356 = vmatprep.subr.mxu0 0.0
    %357 = vmatpush1.msra.mxu0 0.0
    %358 = vmatprep.subr.mxu0 0.0
    %359 = vmatpush1.msra.mxu0 0.0
    %360 = vmatprep.subr.mxu0 0.0
    %361 = vmatpush1.msra.mxu0 0.0
    %362 = vmatprep.subr.mxu0 0.0
    %363 = vmatpush1.msra.mxu0 0.0
    %364 = vmatprep.subr.mxu0 0.0
    %365 = vmatpush1.msra.mxu0 0.0
    %366 = vmatprep.subr.mxu0 0.0
    %367 = vmatpush1.msra.mxu0 0.0
    %368 = vmatprep.subr.mxu0 0.0
    %369 = vmatpush1.msra.mxu0 0.0
    %370 = vmatprep.subr.mxu0 0.0
    %371 = vmatpush1.msra.mxu0 0.0
    %372 = vmatprep.subr.mxu0 0.0
    %373 = vmatpush1.msra.mxu0 0.0
    %374 = vmatprep.subr.mxu0 0.0
    %375 = vmatpush1.msra.mxu0 0.0
    %376 = vmatprep.subr.mxu0 0.0
    %377 = vmatpush1.msra.mxu0 0.0
    %378 = vmatprep.subr.mxu0 0.0
    %379 = vmatpush1.msra.mxu0 0.0
    %380 = vmatprep.subr.mxu0 0.0
    %381 = vmatpush1.msra.mxu0 0.0
    %382 = vmatprep.subr.mxu0 0.0
    %383 = vmatpush1.msra.mxu0 0.0
    %384 = vmatprep.subr.mxu0 0.0
    %385 = vmatpush1.msra.mxu0 0.0
    %386 = vmatprep.subr.mxu0 0.0
    %387 = vmatpush1.msra.mxu0 0.0
    %388 = vmatprep.subr.mxu0 0.0
    %389 = vmatpush1.msra.mxu0 0.0
    %390 = vmatprep.subr.mxu0 0.0
    %391 = vmatpush1.msra.mxu0 0.0
    %392 = vmatprep.subr.mxu0 0.0
    %393 = vmatpush1.msra.mxu0 0.0
    %394 = vmatprep.subr.mxu0 0.0
    %395 = vmatpush1.msra.mxu0 0.0
    %396 = vmatprep.subr.mxu0 0.0
    %397 = vmatpush1.msra.mxu0 0.0
    %398 = vmatprep.subr.mxu0 0.0
    %399 = vmatpush1.msra.mxu0 0.0
    %400 = vmatprep.subr.mxu0 0.0
    %401 = vmatpush1.msra.mxu0 0.0
    %402 = vmatprep.subr.mxu0 0.0
    %403 = vmatpush1.msra.mxu0 0.0
    %404 = vmatprep.subr.mxu0 0.0
    %405 = vmatpush1.msra.mxu0 0.0
    %406 = vmatprep.subr.mxu0 0.0
    %407 = vmatpush1.msra.mxu0 0.0
    %408 = vmatprep.subr.mxu0 0.0
    %409 = vmatpush1.msra.mxu0 0.0
    %410 = vmatprep.subr.mxu0 0.0
    %411 = vmatpush1.msra.mxu0 0.0
    %412 = vmatprep.mubr.f32.mxu0 0.0
    %413 = vmatmul.mubr.f32.gmra.mrb[0].mxu0 %v72
    %v414 = vpop.f32.mrb[0].mxu0
    %v415 = vadd.f32 %v343, %v414
    %v416 = vpop.f32.mrb[0].mxu0
    %417 = vdwg.mxu0
    %v418 = vmax.f32 %v415, 0.0
    %s419 = smul.u32 %s333, 24
    %s420 = scalar_lea.vmem %s5, %s419
    %v421 = vld [vmem:[%s420] sm:$0xff]
    %v422 = vld [vmem:[%s420 + $0x8] sm:$0xff]
    %v423 = vld [vmem:[%s420 + $0x10] sm:$0xf]
    %s424 = scalar_lea.vmem %s6, %s333
    %v425 = vld [vmem:[%s424] sm:$0x1]
    %v427 = vlaneseq
    %v428 = vshrl.u32 %v427, 7
    %v429 = vsub.s32 0, %v428
    %v430 = vrot.slane %v425, %v429
    %v433 = vsel %vm162, %v418, 0
    %v436 = vsel %vm166, %v423, 0
    %438 = vmatprep.subr.mxu0 0.0
    %439 = vmatpush1.msra.mxu0 %v421
    %440 = vmatprep.subr.mxu0 0.0
    %441 = vmatpush1.msra.mxu0 %v422
    %442 = vmatprep.subr.mxu0 0.0
    %443 = vmatpush1.msra.mxu0 %v436
    %444 = vmatprep.subr.mxu0 0.0
    %445 = vmatpush1.msra.mxu0 0.0
    %446 = vmatprep.subr.mxu0 0.0
    %447 = vmatpush1.msra.mxu0 0.0
    %448 = vmatprep.subr.mxu0 0.0
    %449 = vmatpush1.msra.mxu0 0.0
    %450 = vmatprep.subr.mxu0 0.0
    %451 = vmatpush1.msra.mxu0 0.0
    %452 = vmatprep.subr.mxu0 0.0
    %453 = vmatpush1.msra.mxu0 0.0
    %454 = vmatprep.subr.mxu0 0.0
    %455 = vmatpush1.msra.mxu0 0.0
    %456 = vmatprep.subr.mxu0 0.0
    %457 = vmatpush1.msra.mxu0 0.0
    %458 = vmatprep.subr.mxu0 0.0
    %459 = vmatpush1.msra.mxu0 0.0
    %460 = vmatprep.subr.mxu0 0.0
    %461 = vmatpush1.msra.mxu0 0.0
    %462 = vmatprep.subr.mxu0 0.0
    %463 = vmatpush1.msra.mxu0 0.0
    %464 = vmatprep.subr.mxu0 0.0
    %465 = vmatpush1.msra.mxu0 0.0
    %466 = vmatprep.subr.mxu0 0.0
    %467 = vmatpush1.msra.mxu0 0.0
    %468 = vmatprep.subr.mxu0 0.0
    %469 = vmatpush1.msra.mxu0 0.0
    %470 = vmatprep.subr.mxu0 0.0
    %471 = vmatpush1.msra.mxu0 0.0
    %472 = vmatprep.subr.mxu0 0.0
    %473 = vmatpush1.msra.mxu0 0.0
    %474 = vmatprep.subr.mxu0 0.0
    %475 = vmatpush1.msra.mxu0 0.0
    %476 = vmatprep.subr.mxu0 0.0
    %477 = vmatpush1.msra.mxu0 0.0
    %478 = vmatprep.subr.mxu0 0.0
    %479 = vmatpush1.msra.mxu0 0.0
    %480 = vmatprep.subr.mxu0 0.0
    %481 = vmatpush1.msra.mxu0 0.0
    %482 = vmatprep.subr.mxu0 0.0
    %483 = vmatpush1.msra.mxu0 0.0
    %484 = vmatprep.subr.mxu0 0.0
    %485 = vmatpush1.msra.mxu0 0.0
    %486 = vmatprep.subr.mxu0 0.0
    %487 = vmatpush1.msra.mxu0 0.0
    %488 = vmatprep.subr.mxu0 0.0
    %489 = vmatpush1.msra.mxu0 0.0
    %490 = vmatprep.subr.mxu0 0.0
    %491 = vmatpush1.msra.mxu0 0.0
    %492 = vmatprep.subr.mxu0 0.0
    %493 = vmatpush1.msra.mxu0 0.0
    %494 = vmatprep.subr.mxu0 0.0
    %495 = vmatpush1.msra.mxu0 0.0
    %496 = vmatprep.subr.mxu0 0.0
    %497 = vmatpush1.msra.mxu0 0.0
    %498 = vmatprep.subr.mxu0 0.0
    %499 = vmatpush1.msra.mxu0 0.0
    %500 = vmatprep.subr.mxu0 0.0
    %501 = vmatpush1.msra.mxu0 0.0
    %502 = vmatprep.mubr.f32.mxu0 0.0
    %503 = vmatmul.mubr.f32.gmra.mrb[0].mxu0 %v433
    %v504 = vpop.f32.mrb[0].mxu0
    %v505 = vadd.f32 %v430, %v504
    %v506 = vpop.f32.mrb[0].mxu0
    %507 = vdwg.mxu0
    %v508 = vmax.f32 %v505, 0.0
    %s509 = scalar_lea.vmem %s7, %s419
    %v510 = vld [vmem:[%s509] sm:$0xff]
    %v511 = vld [vmem:[%s509 + $0x8] sm:$0xff]
    %v512 = vld [vmem:[%s509 + $0x10] sm:$0xf]
    %s513 = scalar_lea.vmem %s8, %s333
    %v514 = vld [vmem:[%s513] sm:$0x1]
    %v516 = vlaneseq
    %v517 = vshrl.u32 %v516, 7
    %v518 = vsub.s32 0, %v517
    %v519 = vrot.slane %v514, %v518
    %v522 = vsel %vm162, %v508, 0
    %v525 = vsel %vm166, %v512, 0
    %527 = vmatprep.subr.mxu0 0.0
    %528 = vmatpush1.msra.mxu0 %v510
    %529 = vmatprep.subr.mxu0 0.0
    %530 = vmatpush1.msra.mxu0 %v511
    %531 = vmatprep.subr.mxu0 0.0
    %532 = vmatpush1.msra.mxu0 %v525
    %533 = vmatprep.subr.mxu0 0.0
    %534 = vmatpush1.msra.mxu0 0.0
    %535 = vmatprep.subr.mxu0 0.0
    %536 = vmatpush1.msra.mxu0 0.0
    %537 = vmatprep.subr.mxu0 0.0
    %538 = vmatpush1.msra.mxu0 0.0
    %539 = vmatprep.subr.mxu0 0.0
    %540 = vmatpush1.msra.mxu0 0.0
    %541 = vmatprep.subr.mxu0 0.0
    %542 = vmatpush1.msra.mxu0 0.0
    %543 = vmatprep.subr.mxu0 0.0
    %544 = vmatpush1.msra.mxu0 0.0
    %545 = vmatprep.subr.mxu0 0.0
    %546 = vmatpush1.msra.mxu0 0.0
    %547 = vmatprep.subr.mxu0 0.0
    %548 = vmatpush1.msra.mxu0 0.0
    %549 = vmatprep.subr.mxu0 0.0
    %550 = vmatpush1.msra.mxu0 0.0
    %551 = vmatprep.subr.mxu0 0.0
    %552 = vmatpush1.msra.mxu0 0.0
    %553 = vmatprep.subr.mxu0 0.0
    %554 = vmatpush1.msra.mxu0 0.0
    %555 = vmatprep.subr.mxu0 0.0
    %556 = vmatpush1.msra.mxu0 0.0
    %557 = vmatprep.subr.mxu0 0.0
    %558 = vmatpush1.msra.mxu0 0.0
    %559 = vmatprep.subr.mxu0 0.0
    %560 = vmatpush1.msra.mxu0 0.0
    %561 = vmatprep.subr.mxu0 0.0
    %562 = vmatpush1.msra.mxu0 0.0
    %563 = vmatprep.subr.mxu0 0.0
    %564 = vmatpush1.msra.mxu0 0.0
    %565 = vmatprep.subr.mxu0 0.0
    %566 = vmatpush1.msra.mxu0 0.0
    %567 = vmatprep.subr.mxu0 0.0
    %568 = vmatpush1.msra.mxu0 0.0
    %569 = vmatprep.subr.mxu0 0.0
    %570 = vmatpush1.msra.mxu0 0.0
    %571 = vmatprep.subr.mxu0 0.0
    %572 = vmatpush1.msra.mxu0 0.0
    %573 = vmatprep.subr.mxu0 0.0
    %574 = vmatpush1.msra.mxu0 0.0
    %575 = vmatprep.subr.mxu0 0.0
    %576 = vmatpush1.msra.mxu0 0.0
    %577 = vmatprep.subr.mxu0 0.0
    %578 = vmatpush1.msra.mxu0 0.0
    %579 = vmatprep.subr.mxu0 0.0
    %580 = vmatpush1.msra.mxu0 0.0
    %581 = vmatprep.subr.mxu0 0.0
    %582 = vmatpush1.msra.mxu0 0.0
    %583 = vmatprep.subr.mxu0 0.0
    %584 = vmatpush1.msra.mxu0 0.0
    %585 = vmatprep.subr.mxu0 0.0
    %586 = vmatpush1.msra.mxu0 0.0
    %587 = vmatprep.subr.mxu0 0.0
    %588 = vmatpush1.msra.mxu0 0.0
    %589 = vmatprep.subr.mxu0 0.0
    %590 = vmatpush1.msra.mxu0 0.0
    %591 = vmatprep.mubr.f32.mxu0 0.0
    %592 = vmatmul.mubr.f32.gmra.mrb[0].mxu0 %v522
    %v593 = vpop.f32.mrb[0].mxu0
    %v594 = vadd.f32 %v519, %v593
    %v595 = vpop.f32.mrb[0].mxu0
    %596 = vdwg.mxu0
    %s597 = sld [smem:[#allocation4 + $0x1]]
    %v598 = vstv %s597
    %v599 = vmul.f32 %v594, %v598
    %v600 = vadd.f32 %v332, %v599
    %601 = vst.msk [vmem:[%s9] sm:$0xff] %vm70, %v600
    // Predicated region
    $region46: #{vector_forward.1} parent=1 // pred_check
      _
    $region47: #{vector_forward.1} parent=1 // pred_check_branch
      %603 = sbr.rel (0) target = $region49
    $region48: #{vector_forward.1} parent=1 // pred_region
      _
    $region49: #{vector_forward.1} parent=1 // pred_fallthru
      _
    // Predicated region
    $region50: #{vector_forward.1} parent=1 // pred_check
      _
    $region51: #{vector_forward.1} parent=1 // pred_check_branch
      %605 = sbr.rel (0) target = $region53
    $region52: #{vector_forward.1} parent=1 // pred_region
      _
    $region53: #{vector_forward.1} parent=1 // pred_fallthru
      _
    %606 = vsyncpa [#allocation3], 1
    %607 = vsyncpa [#allocation5], 1

</llo_original>
